<compile_context>
chip_gen: v5e
topology: v5e:2x2
jax: 0.10.0
libtpu: 0.0.40
codegen_flags: <defaults>
</compile_context>

<pallas_src>
import functools

import jax
import jax.numpy as jnp
from jax.experimental import pallas as pl
from jax.experimental.pallas import tpu as pltpu


def _rmsnorm_kernel(x_ref, w_ref, o_ref, *, eps):
    # x_ref: (TM, H) tile of hidden_states; w_ref: (1, H) weight.
    x = x_ref[...]
    input_dtype = x.dtype
    xf = x.astype(jnp.float32)
    variance = jnp.mean(xf * xf, axis=-1, keepdims=True)
    normed = xf * jax.lax.rsqrt(variance + eps)
    # Match torch: weight * hidden_states.to(input_dtype); do the multiply in
    # f32 and round once to the (promoted) output dtype.
    out = w_ref[...].astype(jnp.float32) * normed.astype(input_dtype).astype(jnp.float32)
    o_ref[...] = out.astype(o_ref.dtype)


def _pick_row_tile(rows, hidden, in_itemsize, out_itemsize, vmem_tile_budget):
    """Largest row tile (multiple of the sublane-packing base) whose
    double-buffered in+out tiles fit the VMEM budget, capped at 1024."""
    # 32-bit packs 8 rows/sublane-tile, bf16 packs 16, int8/fp8 pack 32.
    base = max(8, 32 // int(min(in_itemsize, out_itemsize)))
    per_row_bytes = hidden * (in_itemsize + out_itemsize)
    fit = max(base, vmem_tile_budget // (2 * per_row_bytes))  # 2x: double buffer
    tm = min(1024, (fit // base) * base)
    tm = max(base, tm)
    if rows <= tm:
        return rows  # single block; a full-extent block dim is always legal
    return tm


def qwen2_rmsnorm(hidden_states, weight, eps=1e-6, row_tile=None):
    """hidden_states: [..., hidden]; weight: [hidden]."""
    orig_shape = hidden_states.shape
    hidden = orig_shape[-1]
    x2d = hidden_states.reshape(-1, hidden)
    rows = x2d.shape[0]

    # torch promotion rule for `weight * x.to(input_dtype)`:
    # bf16 weight + bf16 x -> bf16 (bandwidth win); f32 weight -> f32.
    out_dtype = jnp.result_type(weight.dtype, hidden_states.dtype)
    in_sz = jnp.dtype(hidden_states.dtype).itemsize
    out_sz = jnp.dtype(out_dtype).itemsize
    w_sz = jnp.dtype(weight.dtype).itemsize

    # ~40 MiB for the double-buffered tiles keeps us safely inside v7x's
    # 64 MiB physical VMEM and far inside v5e/v6e's 128 MiB.
    VMEM_TILE_BUDGET = 40 * 1024 * 1024
    if row_tile is None:
        tm = _pick_row_tile(rows, hidden, in_sz, out_sz, VMEM_TILE_BUDGET)
    else:
        tm = min(int(row_tile), rows)

    w2d = weight.reshape(1, hidden)
    grid = (pl.cdiv(rows, tm),)  # ragged last block is clipped by Pallas

    tile_bytes = 2 * tm * hidden * (in_sz + out_sz)  # double-buffered in + out
    weight_bytes = 2 * hidden * w_sz
    vmem_limit = int(min(max(tile_bytes + weight_bytes + (8 << 20), 32 << 20), 60 << 20))

    out = pl.pallas_call(
        functools.partial(_rmsnorm_kernel, eps=eps),
        out_shape=jax.ShapeDtypeStruct((rows, hidden), out_dtype),
        grid_spec=pl.GridSpec(
            grid=grid,
            in_specs=[
                pl.BlockSpec((tm, hidden), lambda i: (i, 0)),
                pl.BlockSpec((1, hidden), lambda i: (0, 0)),
            ],
            out_specs=pl.BlockSpec((tm, hidden), lambda i: (i, 0)),
        ),
        compiler_params=pltpu.CompilerParams(
            dimension_semantics=("parallel",),  # shards rows across v7x's 2 TCs
            vmem_limit_bytes=vmem_limit,
        ),
    )(x2d, w2d)

    return out.reshape(orig_shape[:-1] + (hidden,))


def rmsnorm_reference(hidden_states, weight, eps=1e-6):
    input_dtype = hidden_states.dtype
    xf = hidden_states.astype(jnp.float32)
    variance = jnp.mean(xf * xf, axis=-1, keepdims=True)
    xf = xf * jax.lax.rsqrt(variance + eps)
    return weight * xf.astype(input_dtype)


if __name__ == "__main__":
    key = jax.random.PRNGKey(0)
    k1, k2, k3, k4 = jax.random.split(key, 4)

    # --- Test 1: f32 activations, f32 weight (torch default: ones) ----------
    batch, seq, hidden = 2, 8, 32
    x = jax.random.normal(k1, (batch, seq, hidden), dtype=jnp.float32)
    weight = jnp.ones((hidden,), dtype=jnp.float32)
    out = jax.block_until_ready(qwen2_rmsnorm(x, weight, eps=1e-6))
    ref = rmsnorm_reference(x, weight, eps=1e-6)
    assert out.shape == x.shape and out.dtype == jnp.float32, (out.shape, out.dtype)
    assert jnp.allclose(out, ref, atol=1e-5, rtol=1e-5), "f32 mismatch vs reference"

    # --- Test 2: bf16 activations + bf16 weight (deployed-model path) -------
    xb = jax.random.normal(k2, (batch, seq, hidden), dtype=jnp.float32).astype(jnp.bfloat16)
    wb = (1.0 + 0.1 * jax.random.normal(k3, (hidden,), dtype=jnp.float32)).astype(jnp.bfloat16)
    outb = jax.block_until_ready(qwen2_rmsnorm(xb, wb, eps=1e-6))
    refb = rmsnorm_reference(xb, wb, eps=1e-6)
    assert outb.dtype == jnp.bfloat16, outb.dtype
    assert jnp.allclose(outb.astype(jnp.float32), refb.astype(jnp.float32),
                        atol=2e-2, rtol=2e-2), "bf16 mismatch vs reference"

    # --- Test 3: ragged grid (rows not a multiple of the tile, no padding) ---
    xr = jax.random.normal(k4, (3, 5, hidden), dtype=jnp.float32)  # 15 rows
    outr = jax.block_until_ready(qwen2_rmsnorm(xr, weight, eps=1e-6, row_tile=8))
    refr = rmsnorm_reference(xr, weight, eps=1e-6)
    assert jnp.allclose(outr, refr, atol=1e-5, rtol=1e-5), "ragged-grid mismatch"

    print("KERNEL_OK")
</pallas_src>

<mosaic_0001>
module attributes {stable_mosaic.version = 11 : i64} {
  func.func @_rmsnorm_kernel(%arg0: i32, %arg1: memref<16x32xf32, #tpu.memory_space<vmem>>, %arg2: memref<1x32xf32, #tpu.memory_space<vmem>>, %arg3: memref<16x32xf32, #tpu.memory_space<vmem>>) attributes {dimension_semantics = [#tpu.dimension_semantics<parallel>], iteration_bounds = array<i64: 1>, scalar_prefetch = 0 : i64, scratch_operands = 0 : i64, tpu.core_type = #tpu.core_type<tc>, window_params = [{transform_indices = @transform_0, window_bounds = array<i64: 16, 32>}, {pipeline_mode = #tpu.pipeline_mode<synchronous>, transform_indices = @transform_1, window_bounds = array<i64: 1, 32>}, {transform_indices = @transform_2, window_bounds = array<i64: 16, 32>}]} {
    %c0 = arith.constant 0 : index
    %c0_0 = arith.constant 0 : index
    %0 = vector.load %arg1[%c0, %c0_0] : memref<16x32xf32, #tpu.memory_space<vmem>>, vector<16x32xf32>
    %1 = arith.mulf %0, %0 : vector<16x32xf32>
    %cst = arith.constant dense<0.000000e+00> : vector<16xf32>
    %2 = vector.multi_reduction <add>, %1, %cst [1] : vector<16x32xf32> to vector<16xf32>
    %3 = vector.shape_cast %2 : vector<16xf32> to vector<16x1xf32>
    %cst_1 = arith.constant 3.200000e+01 : f32
    %4 = vector.broadcast %cst_1 : f32 to vector<16x1xf32>
    %5 = arith.divf %3, %4 : vector<16x1xf32>
    %cst_2 = arith.constant 9.99999997E-7 : f32
    %6 = vector.broadcast %cst_2 : f32 to vector<16x1xf32>
    %7 = arith.addf %5, %6 : vector<16x1xf32>
    %8 = math.rsqrt %7 : vector<16x1xf32>
    %9 = vector.broadcast %8 : vector<16x1xf32> to vector<16x32xf32>
    %10 = arith.mulf %0, %9 : vector<16x32xf32>
    %c0_3 = arith.constant 0 : index
    %c0_4 = arith.constant 0 : index
    %11 = vector.load %arg2[%c0_3, %c0_4] : memref<1x32xf32, #tpu.memory_space<vmem>>, vector<1x32xf32>
    %12 = vector.broadcast %11 : vector<1x32xf32> to vector<16x32xf32>
    %13 = arith.mulf %12, %10 : vector<16x32xf32>
    %c0_5 = arith.constant 0 : index
    %c0_6 = arith.constant 0 : index
    %14 = vector.load %arg3[%c0_5, %c0_6] : memref<16x32xf32, #tpu.memory_space<vmem>>, vector<16x32xf32>
    tpu.vector_store %arg3[%c0_5, %c0_6], %13 {strides = array<i32>} : memref<16x32xf32, #tpu.memory_space<vmem>>, vector<16x32xf32>,
    return
  }
  func.func @transform_0(%arg0: i32) -> (i32, i32) {
    %c0_i32 = arith.constant 0 : i32
    %c0_i32_0 = arith.constant 0 : i32
    return %arg0, %c0_i32 : i32, i32
  }
  func.func @transform_1(%arg0: i32) -> (i32, i32) {
    %c0_i32 = arith.constant 0 : i32
    %c0_i32_0 = arith.constant 0 : i32
    %c0_i32_1 = arith.constant 0 : i32
    return %c0_i32, %c0_i32_0 : i32, i32
  }
  func.func @transform_2(%arg0: i32) -> (i32, i32) {
    %c0_i32 = arith.constant 0 : i32
    %c0_i32_0 = arith.constant 0 : i32
    return %arg0, %c0_i32 : i32, i32
  }
}

</mosaic_0001>

<llo_original>
// kernel: tpu_custom_call.1
$region0: #{tpu_custom_call.1}
  #allocation0 [shape = 'u32[]', space=smem, size = 0x4, offset = 0x4, fixed_abs, tag = 'smem constant byte address 0x4 - core index']
  #allocation1 [shape = 'u32[72,128]{1,0:T(1,128)}', space=vmem, size = 0x9000, scoped, tag = 'internal scratch']
  %s0 = inlined_call_operand.hbm [shape: f32[16,32], index: 0, kind: input, shape index: {}]
  %s1 = inlined_call_operand.hbm [shape: f32[1,32], index: 1, kind: input, shape index: {}]
  %s2 = inlined_call_operand.hbm [shape: f32[16,32], index: 2, kind: output, shape index: {}]
  %s3 = sld [smem:[#allocation0]]
  $region26: #{tpu_custom_call.1} parent=0
    _
  %s5 = ssub.s32 1, %s3
  %s6 = scalar_select 0, %s5, %s3
  $region1: #{tpu_custom_call.1} parent=0
    #allocation2 [shape = 'u8[8192]{0}', space=vmem, size = 0x2000, scoped, tag = 'input window, operand 0, single buffered']
    #allocation3 [shape = 's32[1]{0}', space=sflag, size = 0x4, scoped, tag = 'scoped memory for tpu_custom_call.1']
    #allocation4 [shape = 's32[1]{0}', space=sflag, size = 0x4, scoped, tag = 'scoped memory for tpu_custom_call.1']
    #allocation5 [shape = 'u8[512]{0}', space=vmem, size = 0x400, scoped, tag = 'input window, operand 1, single buffered']
    #allocation6 [shape = 's32[1]{0}', space=sflag, size = 0x4, scoped, tag = 'scoped memory for tpu_custom_call.1']
    #allocation7 [shape = 'u8[8192]{0}', space=vmem, size = 0x2000, scoped, tag = 'output window, operand 0, single buffered']
    %7 = vsyncpa [#allocation3], 0
    %8 = vsyncpa [#allocation6], 0
    %9 = vsyncpa [#allocation4], 0
    // Predicated region
    $region2: #{tpu_custom_call.1} parent=1 // pred_check
      _
    $region3: #{tpu_custom_call.1} parent=1 // pred_check_branch
      %11 = sbr.rel (0) target = $region5
    $region4: #{tpu_custom_call.1} parent=1 // pred_region
      %13 = vsyncadd [#allocation3], 0
      %s14 = sshll.u32 %s0, 4
      %s15 = int_to_ptr.hbm [resolvable:$true] %s14
      %s16 = sshll.u32 [#allocation2], 4
      %s17 = int_to_ptr.vmem [resolvable:$true] %s16
      %22 = dma.hbm_to_vmem [thread:$0]  %s15, 256, %s17, [#allocation3], 128, 128, 8
    $region5: #{tpu_custom_call.1} parent=1 // pred_fallthru
      _
    // Predicated region
    $region6: #{tpu_custom_call.1} parent=1 // pred_check
      _
    $region7: #{tpu_custom_call.1} parent=1 // pred_check_branch
      %24 = sbr.rel (0) target = $region9
    $region8: #{tpu_custom_call.1} parent=1 // pred_region
      %26 = vsyncadd [#allocation6], 0
      %s28 = sshll.u32 %s1, 4
      %s29 = int_to_ptr.hbm [resolvable:$true] %s28
      %s30 = sshll.u32 [#allocation5], 4
      %s31 = int_to_ptr.vmem [resolvable:$true] %s30
      %33 = dma.hbm_to_vmem [thread:$0]  %s29, 16, %s31, [#allocation6]
    $region9: #{tpu_custom_call.1} parent=1 // pred_fallthru
      _
    // Predicated region
    $region10: #{tpu_custom_call.1} parent=1 // pred_check
      _
    $region11: #{tpu_custom_call.1} parent=1 // pred_check_branch
      %35 = sbr.rel (0) target = $region13
    $region12: #{tpu_custom_call.1} parent=1 // pred_region
      %37 = dma.done [#allocation3], 256
    $region13: #{tpu_custom_call.1} parent=1 // pred_fallthru
      _
    // Predicated region
    $region14: #{tpu_custom_call.1} parent=1 // pred_check
      _
    $region15: #{tpu_custom_call.1} parent=1 // pred_check_branch
      %39 = sbr.rel (0) target = $region17
    $region16: #{tpu_custom_call.1} parent=1 // pred_region
      %41 = dma.done [#allocation6], 16
    $region17: #{tpu_custom_call.1} parent=1 // pred_fallthru
      _
    %v42 = vld [vmem:[#allocation2] sm:$0xff]
    %v43 = vld [vmem:[#allocation2 + $0x8] sm:$0xff]
    %v44 = vmul.f32 %v42, %v42
    %v45 = vmul.f32 %v43, %v43
    %vm46 = vcmask 261120
    %v47 = vsel %vm46, %v44, 0.0
    %48 = vadd.xlane.f32.xlu0 %v47
    %v49 = vpop.xlane.xlu0 %48
    %v50 = vsel %vm46, %v45, 0.0
    %51 = vadd.xlane.f32.xlu0 %v50
    %v52 = vpop.xlane.xlu0 %51
    %v53 = vrcp.pop 32.0
    %v54 = vmul.f32 32.0, %v53
    %v55 = vsub.f32 1.0, %v54
    %v56 = vmul.f32 %v53, %v55
    %v57 = vadd.f32 %v53, %v56
    %vm58 = vweird.f32 %v53
    %v59 = vsel %vm58, %v53, %v57
    %v60 = vmul.f32 %v49, %v59
    %v61 = vmul.f32 %v52, %v59
    %v62 = vadd.f32 %v60, 1e-06
    %v63 = vadd.f32 %v61, 1e-06
    %v64 = vrsqrt.pop %v62
    %v65 = vmul.f32 %v64, %v62
    %v66 = vmul.f32 %v65, %v64
    %v67 = vmul.f32 0.5, %v66
    %v68 = vsub.f32 1.5, %v67
    %v69 = vmul.f32 %v64, %v68
    %vm70 = vweird.f32 %v62
    %vm71 = vweird.f32 %v64
    %vm72 = vmor %vm70, %vm71
    %v73 = vsel %vm72, %v64, %v69
    %v74 = vrsqrt.pop %v63
    %v75 = vmul.f32 %v74, %v63
    %v76 = vmul.f32 %v75, %v74
    %v77 = vmul.f32 0.5, %v76
    %v78 = vsub.f32 1.5, %v77
    %v79 = vmul.f32 %v74, %v78
    %vm80 = vweird.f32 %v63
    %vm81 = vweird.f32 %v74
    %vm82 = vmor %vm80, %vm81
    %v83 = vsel %vm82, %v74, %v79
    %v84 = vmul.f32 %v42, %v73
    %v85 = vmul.f32 %v43, %v83
    %v86 = vld [vmem:[#allocation5] sm:$0x1]
    %v88 = vperm.slane %v86, 0
    %v90 = vmul.f32 %v88, %v84
    %v91 = vmul.f32 %v88, %v85
    %92 = vst.msk [vmem:[#allocation7] sm:$0xff] %vm46, %v90
    %93 = vst.msk [vmem:[#allocation7 + $0x8] sm:$0xff] %vm46, %v91
    // Predicated region
    $region18: #{tpu_custom_call.1} parent=1 // pred_check
      _
    $region19: #{tpu_custom_call.1} parent=1 // pred_check_branch
      %95 = sbr.rel (0) target = $region21
    $region20: #{tpu_custom_call.1} parent=1 // pred_region
      %97 = vsyncadd [#allocation4], 0
      %s98 = sshll.u32 [#allocation7], 4
      %s99 = int_to_ptr.vmem [resolvable:$true] %s98
      %s100 = sshll.u32 %s2, 4
      %s101 = int_to_ptr.hbm [resolvable:$true] %s100
      %106 = dma.vmem_to_hbm [thread:$0]  %s99, 256, %s101, [#allocation4], 128, 128, 8
    $region21: #{tpu_custom_call.1} parent=1 // pred_fallthru
      _
    // Predicated region
    $region22: #{tpu_custom_call.1} parent=1 // pred_check
      _
    $region23: #{tpu_custom_call.1} parent=1 // pred_check_branch
      %108 = sbr.rel (0) target = $region25
    $region24: #{tpu_custom_call.1} parent=1 // pred_region
      %110 = dma.done [#allocation4], 256
    $region25: #{tpu_custom_call.1} parent=1 // pred_fallthru
      _
    %111 = vsyncpa [#allocation3], 1
    %112 = vsyncpa [#allocation6], 1
    %113 = vsyncpa [#allocation4], 1

</llo_original>
